<compile_context>
chip_gen: v7x
topology: tpu7x:2x2x1
jax: 0.10.0
libtpu: 0.0.40
codegen_flags: <defaults>
</compile_context>

<pallas_src>
import functools

import jax
import jax.numpy as jnp
from jax.experimental import pallas as pl
from jax.experimental.pallas import tpu as pltpu

_NCOLS = 512                            # lane-dense last dim (multiple of 128)
_MAX_BLOCK_BYTES = 4 * 1024 * 1024      # per-block cap (review: 4-8 MiB)
_MIN_BLOCKS = 4                         # >= 2 TCs * 2 for megacore + pipelining
_SPLIT_BYTES = 512 * 1024               # only force splitting above this size
_VMEM_HEADROOM_BYTES = 8 * 1024 * 1024  # leave headroom under vmem_limit_bytes


@functools.lru_cache(maxsize=None)
def _vmem_limit_bytes():
    """Per-generation VMEM limit: ~48 MiB on v7x (64 MiB), 64 MiB on v5e/v6e."""
    cap = 64 * 1024 * 1024
    try:
        info = pltpu.get_tpu_info()
        cap_attr = getattr(info, "vmem_capacity_bytes", None)
        if cap_attr:
            cap = int(cap_attr)
    except Exception:
        pass
    return min(64 * 1024 * 1024, (cap * 3) // 4)


def _make_add_kernel(n_inputs: int, acc_dtype):
    """Kernel that sums `n_inputs` refs elementwise into the output ref."""

    def add_kernel(*refs):
        in_refs = refs[:n_inputs]
        o_ref = refs[n_inputs]
        acc = in_refs[0][...].astype(acc_dtype)
        for r in in_refs[1:]:
            acc = acc + r[...].astype(acc_dtype)
        o_ref[...] = acc.astype(o_ref.dtype)

    return add_kernel


def add(*args):
    """Pallas equivalent of Add.forward(*args) == sum(args)."""
    assert len(args) >= 1, "Add requires at least one input"
    if len(args) == 1:
        return args[0]                      # sum of one tensor is itself

    x0 = args[0]
    shape = x0.shape
    dtype = x0.dtype
    for a in args[1:]:
        assert a.shape == shape and a.dtype == dtype, (
            "Add kernel expects identical shapes/dtypes (matches module usage)"
        )

    n = len(args)
    total = 1
    for d in shape:
        total *= int(d)
    elem = jnp.dtype(dtype).itemsize
    granule = max(8, 32 // elem)            # sublane packing granule per dtype

    # f32 accumulation for narrow floats only when it matters numerically.
    if jnp.issubdtype(dtype, jnp.floating) and elem < 4 and n >= 3:
        acc_dtype = jnp.float32
    else:
        acc_dtype = dtype

    prefix = (total // _NCOLS) * _NCOLS     # lane-dense part handled by Pallas
    tail = total - prefix                   # < 512 elems handled by plain XLA

    flats = [a.reshape(-1) for a in args]   # contiguous flatten: bitcast, free

    # ---- tiny tail (also covers inputs smaller than one 512-lane row) ----
    tail_out = None
    if tail:
        t = flats[0][prefix:].astype(acc_dtype)
        for fl in flats[1:]:
            t = t + fl[prefix:].astype(acc_dtype)
        tail_out = t.astype(dtype)

    # ---- lane-dense Pallas path over the 512-divisible prefix ----
    main_out = None
    if prefix:
        rows = prefix // _NCOLS
        row_bytes = _NCOLS * elem

        vmem_limit = _vmem_limit_bytes()
        block_budget = max(vmem_limit - _VMEM_HEADROOM_BYTES, 4 * 1024 * 1024)
        # (n inputs + 1 output) double-buffered, +2 blocks margin for temporaries.
        per_block = block_budget // ((n + 1) * 2 + 2)
        per_block = min(max(per_block, granule * row_bytes), _MAX_BLOCK_BYTES)
        block_rows = max(granule, (per_block // row_bytes) // granule * granule)

        # Guarantee a multi-block grid for non-trivial sizes (megacore + overlap).
        if rows * row_bytes > _SPLIT_BYTES:
            target = -(-rows // _MIN_BLOCKS)
            target = -(-target // granule) * granule
            block_rows = min(block_rows, max(granule, target))

        if block_rows >= rows:
            block_rows = rows               # single block == full array (legal)
            num_blocks = 1
        else:
            num_blocks = -(-rows // block_rows)   # boundary block masked by Pallas

        mains = [
            (fl if tail == 0 else fl[:prefix]).reshape(rows, _NCOLS)
            for fl in flats
        ]

        spec = pl.BlockSpec((block_rows, _NCOLS), lambda i: (i, 0))
        out2d = pl.pallas_call(
            _make_add_kernel(n, acc_dtype),
            out_shape=jax.ShapeDtypeStruct((rows, _NCOLS), dtype),
            grid=(num_blocks,),
            in_specs=[spec] * n,
            out_specs=spec,
            compiler_params=pltpu.CompilerParams(
                dimension_semantics=("parallel",),
                vmem_limit_bytes=vmem_limit,
            ),
        )(*mains)
        main_out = out2d.reshape(-1)

    if main_out is None:
        flat_out = tail_out
    elif tail_out is None:
        flat_out = main_out
    else:
        flat_out = jnp.concatenate([main_out, tail_out])
    return flat_out.reshape(shape)


if __name__ == "__main__":
    key = jax.random.PRNGKey(0)
    ks = jax.random.split(key, 12)

    # Test 1: small NCHW f32, 3 inputs -> lane-dense Pallas path (single block).
    shape = (2, 4, 16, 16)
    a = jax.random.normal(ks[0], shape, dtype=jnp.float32)
    b = jax.random.normal(ks[1], shape, dtype=jnp.float32)
    c = jax.random.normal(ks[2], shape, dtype=jnp.float32)
    out = jax.block_until_ready(add(a, b, c))
    assert jnp.allclose(out, a + b + c, atol=1e-6, rtol=1e-6), "mismatch (test 1)"

    # Test 2: larger input -> multi-block grid (pipelining / megacore path).
    shape2 = (8, 8, 64, 64)
    d = jax.random.normal(ks[3], shape2, dtype=jnp.float32)
    e = jax.random.normal(ks[4], shape2, dtype=jnp.float32)
    out2 = jax.block_until_ready(add(d, e))
    assert jnp.allclose(out2, d + e, atol=1e-6, rtol=1e-6), "mismatch (test 2)"

    # Test 3: awkward size -> Pallas prefix + tiny XLA tail.
    shape3 = (7, 9, 65)
    f = jax.random.normal(ks[5], shape3, dtype=jnp.float32)
    g = jax.random.normal(ks[6], shape3, dtype=jnp.float32)
    out3 = jax.block_until_ready(add(f, g))
    assert jnp.allclose(out3, f + g, atol=1e-6, rtol=1e-6), "mismatch (test 3)"

    # Test 4: very small awkward size -> pure XLA tail path.
    shape4 = (3, 5, 7)
    h = jax.random.normal(ks[7], shape4, dtype=jnp.float32)
    i = jax.random.normal(ks[8], shape4, dtype=jnp.float32)
    out4 = jax.block_until_ready(add(h, i))
    assert jnp.allclose(out4, h + i, atol=1e-6, rtol=1e-6), "mismatch (test 4)"

    # Test 5: bf16 with n >= 3 -> f32 accumulation, dtype-aware granule.
    p = jax.random.normal(ks[9], shape, dtype=jnp.bfloat16)
    q = jax.random.normal(ks[10], shape, dtype=jnp.bfloat16)
    r = jax.random.normal(ks[11], shape, dtype=jnp.bfloat16)
    out5 = jax.block_until_ready(add(p, q, r))
    ref5 = (p.astype(jnp.float32) + q.astype(jnp.float32)
            + r.astype(jnp.float32)).astype(jnp.bfloat16)
    assert jnp.allclose(out5.astype(jnp.float32), ref5.astype(jnp.float32),
                        atol=2e-2, rtol=2e-2), "mismatch (test 5)"

    # Test 6: single input short-circuit.
    out6 = jax.block_until_ready(add(a))
    assert jnp.allclose(out6, a), "mismatch (test 6)"

    print("KERNEL_OK")
</pallas_src>

<mosaic_0001>
module attributes {stable_mosaic.version = 11 : i64} {
  func.func @add_kernel(%arg0: i32, %arg1: memref<4x512xf32, #tpu.memory_space<vmem>>, %arg2: memref<4x512xf32, #tpu.memory_space<vmem>>, %arg3: memref<4x512xf32, #tpu.memory_space<vmem>>, %arg4: memref<4x512xf32, #tpu.memory_space<vmem>>) attributes {dimension_semantics = [#tpu.dimension_semantics<parallel>], iteration_bounds = array<i64: 1>, scalar_prefetch = 0 : i64, scratch_operands = 0 : i64, tpu.core_type = #tpu.core_type<tc>, window_params = [{transform_indices = @transform_0, window_bounds = array<i64: 4, 512>}, {transform_indices = @transform_1, window_bounds = array<i64: 4, 512>}, {transform_indices = @transform_2, window_bounds = array<i64: 4, 512>}, {transform_indices = @transform_3, window_bounds = array<i64: 4, 512>}]} {
    %c0 = arith.constant 0 : index
    %c0_0 = arith.constant 0 : index
    %0 = vector.load %arg1[%c0, %c0_0] : memref<4x512xf32, #tpu.memory_space<vmem>>, vector<4x512xf32>
    %c0_1 = arith.constant 0 : index
    %c0_2 = arith.constant 0 : index
    %1 = vector.load %arg2[%c0_1, %c0_2] : memref<4x512xf32, #tpu.memory_space<vmem>>, vector<4x512xf32>
    %2 = arith.addf %0, %1 : vector<4x512xf32>
    %c0_3 = arith.constant 0 : index
    %c0_4 = arith.constant 0 : index
    %3 = vector.load %arg3[%c0_3, %c0_4] : memref<4x512xf32, #tpu.memory_space<vmem>>, vector<4x512xf32>
    %4 = arith.addf %2, %3 : vector<4x512xf32>
    %c0_5 = arith.constant 0 : index
    %c0_6 = arith.constant 0 : index
    %5 = vector.load %arg4[%c0_5, %c0_6] : memref<4x512xf32, #tpu.memory_space<vmem>>, vector<4x512xf32>
    tpu.vector_store %arg4[%c0_5, %c0_6], %4 {strides = array<i32>} : memref<4x512xf32, #tpu.memory_space<vmem>>, vector<4x512xf32>,
    return
  }
  func.func @transform_0(%arg0: i32) -> (i32, i32) {
    %c0_i32 = arith.constant 0 : i32
    %c0_i32_0 = arith.constant 0 : i32
    return %arg0, %c0_i32 : i32, i32
  }
  func.func @transform_1(%arg0: i32) -> (i32, i32) {
    %c0_i32 = arith.constant 0 : i32
    %c0_i32_0 = arith.constant 0 : i32
    return %arg0, %c0_i32 : i32, i32
  }
  func.func @transform_2(%arg0: i32) -> (i32, i32) {
    %c0_i32 = arith.constant 0 : i32
    %c0_i32_0 = arith.constant 0 : i32
    return %arg0, %c0_i32 : i32, i32
  }
  func.func @transform_3(%arg0: i32) -> (i32, i32) {
    %c0_i32 = arith.constant 0 : i32
    %c0_i32_0 = arith.constant 0 : i32
    return %arg0, %c0_i32 : i32, i32
  }
}

</mosaic_0001>

<llo_original>
// kernel: tpu_custom_call.1
$region0: #{tpu_custom_call.1}
  #allocation0 [shape = 'u32[]', space=smem, size = 0x4, offset = 0x4, fixed_abs, tag = 'smem constant byte address 0x4 - core index']
  #allocation1 [shape = 'u32[144,128]{1,0:T(1,128)}', space=vmem, size = 0x12000, scoped, tag = 'internal scratch']
  %s0 = inlined_call_operand.hbm [shape: f32[4,512], index: 0, kind: input, shape index: {}]
  %s1 = inlined_call_operand.hbm [shape: f32[4,512], index: 1, kind: input, shape index: {}]
  %s2 = inlined_call_operand.hbm [shape: f32[4,512], index: 2, kind: input, shape index: {}]
  %s3 = inlined_call_operand.hbm [shape: f32[4,512], index: 3, kind: output, shape index: {}]
  %s4 = sld [smem:[#allocation0]]
  $region34: #{tpu_custom_call.1} parent=0
    _
  %s6 = ssub.s32 1, %s4
  %s7 = scalar_select 0, %s6, %s4
  $region1: #{tpu_custom_call.1} parent=0
    #allocation2 [shape = 'u8[8192]{0}', space=vmem, size = 0x2000, scoped, tag = 'input window, operand 0, single buffered']
    #allocation3 [shape = 's32[1]{0}', space=sflag, size = 0x4, scoped, tag = 'scoped memory for tpu_custom_call.1']
    #allocation4 [shape = 's32[1]{0}', space=sflag, size = 0x4, scoped, tag = 'scoped memory for tpu_custom_call.1']
    #allocation5 [shape = 'u8[8192]{0}', space=vmem, size = 0x2000, scoped, tag = 'input window, operand 1, single buffered']
    #allocation6 [shape = 's32[1]{0}', space=sflag, size = 0x4, scoped, tag = 'scoped memory for tpu_custom_call.1']
    #allocation7 [shape = 'u8[8192]{0}', space=vmem, size = 0x2000, scoped, tag = 'input window, operand 2, single buffered']
    #allocation8 [shape = 'u8[8192]{0}', space=vmem, size = 0x2000, scoped, tag = 'output window, operand 0, single buffered']
    %8 = vsyncpa [#allocation3], 0
    %9 = vsyncpa [#allocation6], 0
    %10 = vsyncpa [#allocation4], 0
    // Predicated region
    $region2: #{tpu_custom_call.1} parent=1 // pred_check
      _
    $region3: #{tpu_custom_call.1} parent=1 // pred_check_branch
      %12 = sbr.rel (0) target = $region5
    $region4: #{tpu_custom_call.1} parent=1 // pred_region
      %s14 = ssub.s32 256, 256
      %15 = vsyncadd [#allocation3], %s14
      %s17 = sshll.u32 [#allocation2], 4
      %s18 = int_to_ptr.vmem [resolvable:$true] %s17
      %20 = dma.hbm_to_vmem [thread:$0]  %s0, 256, %s18, [#allocation3]
    $region5: #{tpu_custom_call.1} parent=1 // pred_fallthru
      _
    // Predicated region
    $region6: #{tpu_custom_call.1} parent=1 // pred_check
      _
    $region7: #{tpu_custom_call.1} parent=1 // pred_check_branch
      %22 = sbr.rel (0) target = $region9
    $region8: #{tpu_custom_call.1} parent=1 // pred_region
      %s24 = ssub.s32 256, 256
      %25 = vsyncadd [#allocation6], %s24
      %s27 = sshll.u32 [#allocation5], 4
      %s28 = int_to_ptr.vmem [resolvable:$true] %s27
      %30 = dma.hbm_to_vmem [thread:$0]  %s1, 256, %s28, [#allocation6]
    $region9: #{tpu_custom_call.1} parent=1 // pred_fallthru
      _
    // Predicated region
    $region10: #{tpu_custom_call.1} parent=1 // pred_check
      _
    $region11: #{tpu_custom_call.1} parent=1 // pred_check_branch
      %32 = sbr.rel (0) target = $region13
    $region12: #{tpu_custom_call.1} parent=1 // pred_region
      %s34 = ssub.s32 256, 256
      %35 = vsyncadd [#allocation6], %s34
      %s37 = sshll.u32 [#allocation7], 4
      %s38 = int_to_ptr.vmem [resolvable:$true] %s37
      %40 = dma.hbm_to_vmem [thread:$0]  %s2, 256, %s38, [#allocation6]
    $region13: #{tpu_custom_call.1} parent=1 // pred_fallthru
      _
    // Predicated region
    $region14: #{tpu_custom_call.1} parent=1 // pred_check
      _
    $region15: #{tpu_custom_call.1} parent=1 // pred_check_branch
      %42 = sbr.rel (0) target = $region17
    $region16: #{tpu_custom_call.1} parent=1 // pred_region
      %43 = dma.done [#allocation3], 256
    $region17: #{tpu_custom_call.1} parent=1 // pred_fallthru
      _
    // Predicated region
    $region18: #{tpu_custom_call.1} parent=1 // pred_check
      _
    $region19: #{tpu_custom_call.1} parent=1 // pred_check_branch
      %45 = sbr.rel (0) target = $region21
    $region20: #{tpu_custom_call.1} parent=1 // pred_region
      %46 = dma.done [#allocation6], 256
    $region21: #{tpu_custom_call.1} parent=1 // pred_fallthru
      _
    // Predicated region
    $region22: #{tpu_custom_call.1} parent=1 // pred_check
      _
    $region23: #{tpu_custom_call.1} parent=1 // pred_check_branch
      %48 = sbr.rel (0) target = $region25
    $region24: #{tpu_custom_call.1} parent=1 // pred_region
      %49 = dma.done [#allocation6], 256
    $region25: #{tpu_custom_call.1} parent=1 // pred_fallthru
      _
    %v50 = vld [vmem:[#allocation2] sm:$0xff]
    %v51 = vld [vmem:[#allocation2 + $0x8] sm:$0xff]
    %v52 = vld [vmem:[#allocation5] sm:$0xff]
    %v53 = vld [vmem:[#allocation5 + $0x8] sm:$0xff]
    %v54 = vadd.f32 %v50, %v52
    %v55 = vadd.f32 %v51, %v53
    %v56 = vld [vmem:[#allocation7] sm:$0xff]
    %v57 = vld [vmem:[#allocation7 + $0x8] sm:$0xff]
    %v58 = vadd.f32 %v54, %v56
    %v59 = vadd.f32 %v55, %v57
    %60 = vst [vmem:[#allocation8] sm:$0xff] %v58
    %61 = vst [vmem:[#allocation8 + $0x8] sm:$0xff] %v59
    // Predicated region
    $region26: #{tpu_custom_call.1} parent=1 // pred_check
      _
    $region27: #{tpu_custom_call.1} parent=1 // pred_check_branch
      %63 = sbr.rel (0) target = $region29
    $region28: #{tpu_custom_call.1} parent=1 // pred_region
      %s65 = ssub.s32 256, 256
      %66 = vsyncadd [#allocation4], %s65
      %s68 = sshll.u32 [#allocation8], 4
      %s69 = int_to_ptr.vmem [resolvable:$true] %s68
      %71 = dma.vmem_to_hbm [thread:$0]  %s69, 256, %s3, [#allocation4]
    $region29: #{tpu_custom_call.1} parent=1 // pred_fallthru
      _
    // Predicated region
    $region30: #{tpu_custom_call.1} parent=1 // pred_check
      _
    $region31: #{tpu_custom_call.1} parent=1 // pred_check_branch
      %73 = sbr.rel (0) target = $region33
    $region32: #{tpu_custom_call.1} parent=1 // pred_region
      %74 = dma.done [#allocation4], 256
    $region33: #{tpu_custom_call.1} parent=1 // pred_fallthru
      _
    %75 = vsyncpa [#allocation3], 1
    %76 = vsyncpa [#allocation6], 1
    %77 = vsyncpa [#allocation4], 1

</llo_original>
